<compile_context>
chip_gen: v5e
topology: v5e:2x2
jax: 0.10.0
libtpu: 0.0.40
codegen_flags: <defaults>
</compile_context>

<pallas_src>
import functools

import jax
import jax.numpy as jnp
from jax.experimental import pallas as pl
from jax.experimental.pallas import tpu as pltpu

EPS = 1e-5                     # nn.LayerNorm default
_VMEM_BUDGET = 20 << 20        # double-buffered tiles + f32 intermediates budget
_MAX_BLOCK_ROWS = 8192


def _cdiv(a, b):
    return -(-a // b)


def _round_up(a, m):
    return _cdiv(a, m) * m


def _ln_head_kernel(x_ref, wred_ref, sc_ref, o_ref, *, k, eps):
    """Fused LayerNorm + Linear(D -> 1) on a (block_rows, Dp) tile.

    k original rows are packed per 128-lane row (k == 1 when D >= 128), Dp = k*D.

    x_ref   : (block_rows, Dp) VMEM  packed input rows
    wred_ref: (Dp, 128)        VMEM  block-diag reduce matrix:
                                     lane j     (j < k): 1/D on segment j's rows
                                     lane k + j (j < k): gamma*w on segment j's rows
    sc_ref  : (2,)             SMEM  [sum(gamma*w), sum(beta*w) + bias]
    o_ref   : (k, block_rows)  VMEM  lane-dense output
    """
    x = x_ref[...].astype(jnp.float32)                                # (bm, Dp)
    w = wred_ref[...]                                                 # (Dp, 128)
    # Row statistics on the (otherwise idle) MXU instead of XLU reductions.
    stats = jnp.dot(x, w, preferred_element_type=jnp.float32)        # (bm, 128)
    stats2 = jnp.dot(x * x, w, preferred_element_type=jnp.float32)   # (bm, 128)
    mean = stats[:, 0:k]                                              # (bm, k)
    sxw = stats[:, k:2 * k]                                           # (bm, k) sum(x*gamma*w)
    ex2 = stats2[:, 0:k]                                              # (bm, k) E[x^2]
    # One-pass LayerNorm folded with the linear head:
    #   y = rsqrt(var+eps) * (sum(x*g) - mean*sum(g)) + (beta@w + bias),  g = gamma*w
    var = ex2 - mean * mean
    inv_std = jax.lax.rsqrt(var + eps)
    y = inv_std * (sxw - mean * sc_ref[0]) + sc_ref[1]                # (bm, k)
    # Tiny XLU transpose -> full, lane-dense vector stores.
    o_ref[...] = jnp.transpose(y, (1, 0)).astype(o_ref.dtype)


def _pick_block_rows(rows, itemsize):
    """Largest batch tile whose VMEM working set stays inside the budget."""
    # Per packed row: 2x double-buffered input tile (128 lanes) + f32 x^2 tile
    # + two (row, 128) f32 matmul results + epilogue smalls.
    per_row = 128 * (2 * itemsize + 4) + 2 * 512 + 256
    cap = max(128, min(_MAX_BLOCK_ROWS, (_VMEM_BUDGET // per_row) // 128 * 128))
    # >= 2 tiles once there is enough work so ("parallel",) can shard across the two
    # TensorCores on v7x; 128-row tile granularity covers the 8/16/32 sublane
    # multiples for f32/bf16/int8 and keeps output stores unmasked.
    tiles = max(_cdiv(rows, cap), 2 if rows >= 1024 else 1)
    if tiles <= 1:
        return rows            # single full-extent block: exact, no (8,128) concerns
    return min(cap, _round_up(_cdiv(rows, tiles), 128))


def graph_success_predictor(x, gamma, beta, weight, bias, *, block_rows=None):
    """x: (B, 2*dim); params as in nn.LayerNorm(2*dim) / nn.Linear(2*dim, 1).

    Returns the torch `.squeeze()` result: shape (B,) for B > 1, scalar for B == 1.
    """
    B, D = x.shape
    f32 = jnp.float32

    g = gamma.reshape(-1).astype(f32) * weight.reshape(-1).astype(f32)   # gamma ⊙ w
    sum_gw = jnp.sum(g)
    c = (jnp.sum(beta.reshape(-1).astype(f32) * weight.reshape(-1).astype(f32))
         + bias.reshape(-1).astype(f32)[0])
    sc = jnp.stack([sum_gw, c])                                          # (2,) -> SMEM

    # Pack k = 128 // D rows per 128-lane row when D < 128 divides 128 (recovers the
    # 128/D lane-padding factor in VMEM/VPU/MXU work; HBM bytes unchanged).
    k = 128 // D if (D < 128 and 128 % D == 0) else 1
    if k > 1:
        pad = (-B) % k
        if pad:
            # <= k-1 rows; padded rows give finite per-row garbage, sliced off below.
            # TODO(synk): for huge batches with B % k != 0, process the tail rows
            # separately instead of copying the whole array for the pad.
            x = jnp.pad(x, ((0, pad), (0, 0)))
        x = x.reshape(-1, k * D)
    Dp = k * D
    rows = x.shape[0]

    # Block-diagonal reduce matrix fed to the MXU (zero-padded to 128 lanes).
    seg = (jnp.arange(Dp) // D)[:, None]
    lane = jnp.arange(128)[None, :]
    wred = (jnp.where(lane == seg, 1.0 / D, 0.0)
            + jnp.where(lane == k + seg, jnp.tile(g, k)[:, None], 0.0)).astype(f32)

    if block_rows is None:
        block_rows = _pick_block_rows(rows, jnp.dtype(x.dtype).itemsize)
    num_tiles = _cdiv(rows, block_rows)      # tail handled by Pallas partial blocks

    out = pl.pallas_call(
        functools.partial(_ln_head_kernel, k=k, eps=EPS),
        out_shape=jax.ShapeDtypeStruct((k, num_tiles * block_rows), f32),
        grid_spec=pltpu.PrefetchScalarGridSpec(
            num_scalar_prefetch=0,
            grid=(num_tiles,),
            in_specs=[
                pl.BlockSpec((block_rows, Dp), lambda i: (i, 0)),      # packed x tile
                pl.BlockSpec((Dp, 128), lambda i: (0, 0)),             # MXU reduce matrix
                pl.BlockSpec(memory_space=pltpu.MemorySpace.SMEM),     # fused scalars
            ],
            out_specs=pl.BlockSpec((k, block_rows), lambda i: (0, i)), # lane-dense rows
        ),
        compiler_params=pltpu.CompilerParams(
            dimension_semantics=("parallel",),
            vmem_limit_bytes=32 * 1024 * 1024),
    )(x, wred, sc)

    # out[j, p] = result for original row p*k + j; row-major flatten of out.T restores
    # the original order; [:B] drops pack-pad / tail-block garbage rows.
    return jnp.squeeze(out.T.reshape(-1)[:B])


def reference(x, gamma, beta, weight, bias):
    x = x.astype(jnp.float32)
    mean = jnp.mean(x, axis=-1, keepdims=True)
    var = jnp.mean((x - mean) ** 2, axis=-1, keepdims=True)
    xn = (x - mean) / jnp.sqrt(var + EPS)
    y = xn * gamma + beta
    return jnp.squeeze(y @ weight.reshape(-1, 1) + bias)


def _check(B, dim, key, tol=1e-2):
    D = dim * 2
    kx, kg, kb, kw, kbias = jax.random.split(key, 5)
    x = jax.random.normal(kx, (B, D), dtype=jnp.float32)
    gamma = 1.0 + 0.1 * jax.random.normal(kg, (D,), dtype=jnp.float32)     # LN weight
    beta = 0.1 * jax.random.normal(kb, (D,), dtype=jnp.float32)            # LN bias
    weight = jax.random.normal(kw, (D,), dtype=jnp.float32) / jnp.sqrt(D)  # Linear weight
    bias = 0.05 * jax.random.normal(kbias, (1,), dtype=jnp.float32)        # Linear bias
    out = jax.block_until_ready(graph_success_predictor(x, gamma, beta, weight, bias))
    ref = reference(x, gamma, beta, weight, bias)
    assert out.shape == ref.shape, (out.shape, ref.shape)
    # Tolerance covers MXU-based row statistics (one-pass variance; bf16-operand
    # matmul passes on older lowerings); with full-f32 MXU passes error is ~1e-6.
    assert jnp.allclose(out, ref, atol=tol, rtol=tol), (out, ref)


if __name__ == "__main__":
    key = jax.random.PRNGKey(0)
    k0, k1, k2 = jax.random.split(key, 3)
    _check(B=6, dim=16, key=k0)    # D=32: packed path (k=4), batch not a sublane multiple
    _check(B=1, dim=16, key=k1)    # torch .squeeze() scalar case
    _check(B=20, dim=64, key=k2)   # D=128: unpacked path (k=1)
    print("KERNEL_OK")
</pallas_src>

<mosaic_0001>
module attributes {stable_mosaic.version = 11 : i64} {
  func.func @_ln_head_kernel(%arg0: i32, %arg1: memref<2x128xf32, #tpu.memory_space<vmem>>, %arg2: memref<128x128xf32, #tpu.memory_space<vmem>>, %arg3: memref<2xf32, #tpu.memory_space<smem>>, %arg4: memref<4x2xf32, #tpu.memory_space<vmem>>) attributes {dimension_semantics = [#tpu.dimension_semantics<parallel>], iteration_bounds = array<i64: 1>, scalar_prefetch = 0 : i64, scratch_operands = 0 : i64, tpu.core_type = #tpu.core_type<tc>, window_params = [{transform_indices = @transform_0, window_bounds = array<i64: 2, 128>}, {pipeline_mode = #tpu.pipeline_mode<synchronous>, transform_indices = @transform_1, window_bounds = array<i64: 128, 128>}, {transform_indices = @transform_2, window_bounds = array<i64: 2>}, {transform_indices = @transform_3, window_bounds = array<i64: 4, 2>}]} {
    %c0 = arith.constant 0 : index
    %c0_0 = arith.constant 0 : index
    %0 = vector.load %arg1[%c0, %c0_0] : memref<2x128xf32, #tpu.memory_space<vmem>>, vector<2x128xf32>
    %c0_1 = arith.constant 0 : index
    %c0_2 = arith.constant 0 : index
    %1 = vector.load %arg2[%c0_1, %c0_2] : memref<128x128xf32, #tpu.memory_space<vmem>>, vector<128x128xf32>
    %cst = arith.constant dense<0.000000e+00> : vector<2x128xf32>
    %2 = tpu.matmul %0, %1, %cst {dimension_numbers = #tpu.dot_dimension_numbers<[1], [0], [0], [1], [0, 0, 1, 1], [], []>} : vector<2x128xf32>, vector<128x128xf32>, vector<2x128xf32> -> vector<2x128xf32>
    %3 = arith.mulf %0, %0 : vector<2x128xf32>
    %cst_3 = arith.constant dense<0.000000e+00> : vector<2x128xf32>
    %4 = tpu.matmul %3, %1, %cst_3 {dimension_numbers = #tpu.dot_dimension_numbers<[1], [0], [0], [1], [0, 0, 1, 1], [], []>} : vector<2x128xf32>, vector<128x128xf32>, vector<2x128xf32> -> vector<2x128xf32>
    %5 = vector.extract_strided_slice %2 {offsets = [0, 0], sizes = [2, 4], strides = [1, 1]} : vector<2x128xf32> to vector<2x4xf32>
    %6 = vector.extract_strided_slice %2 {offsets = [0, 4], sizes = [2, 4], strides = [1, 1]} : vector<2x128xf32> to vector<2x4xf32>
    %7 = vector.extract_strided_slice %4 {offsets = [0, 0], sizes = [2, 4], strides = [1, 1]} : vector<2x128xf32> to vector<2x4xf32>
    %8 = arith.mulf %5, %5 : vector<2x4xf32>
    %9 = arith.subf %7, %8 : vector<2x4xf32>
    %cst_4 = arith.constant 9.99999974E-6 : f32
    %10 = vector.broadcast %cst_4 : f32 to vector<2x4xf32>
    %11 = arith.addf %9, %10 : vector<2x4xf32>
    %12 = math.rsqrt %11 : vector<2x4xf32>
    %c0_5 = arith.constant 0 : index
    %13 = memref.load %arg3[%c0_5] : memref<2xf32, #tpu.memory_space<smem>>
    %14 = vector.broadcast %13 : f32 to vector<2x4xf32>
    %15 = arith.mulf %5, %14 : vector<2x4xf32>
    %16 = arith.subf %6, %15 : vector<2x4xf32>
    %17 = arith.mulf %12, %16 : vector<2x4xf32>
    %c1 = arith.constant 1 : index
    %18 = memref.load %arg3[%c1] : memref<2xf32, #tpu.memory_space<smem>>
    %19 = vector.broadcast %18 : f32 to vector<2x4xf32>
    %20 = arith.addf %17, %19 : vector<2x4xf32>
    %21 = tpu.transpose %20, [1, 0] : vector<2x4xf32> -> vector<4x2xf32>
    %c0_6 = arith.constant 0 : index
    %c0_7 = arith.constant 0 : index
    %22 = vector.load %arg4[%c0_6, %c0_7] : memref<4x2xf32, #tpu.memory_space<vmem>>, vector<4x2xf32>
    tpu.vector_store %arg4[%c0_6, %c0_7], %21 {strides = array<i32>} : memref<4x2xf32, #tpu.memory_space<vmem>>, vector<4x2xf32>,
    return
  }
  func.func @transform_0(%arg0: i32) -> (i32, i32) {
    %c0_i32 = arith.constant 0 : i32
    %c0_i32_0 = arith.constant 0 : i32
    return %arg0, %c0_i32 : i32, i32
  }
  func.func @transform_1(%arg0: i32) -> (i32, i32) {
    %c0_i32 = arith.constant 0 : i32
    %c0_i32_0 = arith.constant 0 : i32
    %c0_i32_1 = arith.constant 0 : i32
    return %c0_i32, %c0_i32_0 : i32, i32
  }
  func.func @transform_2(%arg0: i32) -> i32 {
    %c0_i32 = arith.constant 0 : i32
    %c0_i32_0 = arith.constant 0 : i32
    return %c0_i32 : i32
  }
  func.func @transform_3(%arg0: i32) -> (i32, i32) {
    %c0_i32 = arith.constant 0 : i32
    %c0_i32_0 = arith.constant 0 : i32
    return %c0_i32, %arg0 : i32, i32
  }
}

</mosaic_0001>

<llo_original>
// kernel: tpu_custom_call.1
$region0: #{tpu_custom_call.1}
  #allocation0 [shape = 'u32[]', space=smem, size = 0x4, offset = 0x4, fixed_abs, tag = 'smem constant byte address 0x4 - core index']
  #allocation1 [shape = 'u32[72,128]{1,0:T(1,128)}', space=vmem, size = 0x9000, scoped, tag = 'internal scratch']
  %s0 = inlined_call_operand.hbm [shape: f32[2,128], index: 0, kind: input, shape index: {}]
  %s1 = inlined_call_operand.hbm [shape: f32[128,128], index: 1, kind: input, shape index: {}]
  %s2 = inlined_call_operand.vmem [shape: f32[2], index: 2, kind: input, shape index: {}]
  %s3 = inlined_call_operand.vmem [shape: f32[4,2], index: 3, kind: output, shape index: {}]
  %s4 = sld [smem:[#allocation0]]
  $region34: #{tpu_custom_call.1} parent=0
    _
  %s6 = ssub.s32 1, %s4
  %s7 = scalar_select 0, %s6, %s4
  $region1: #{tpu_custom_call.1} parent=0
    #allocation2 [shape = 'u8[1024]{0}', space=vmem, size = 0x400, scoped, tag = 'input window, operand 0, single buffered']
    #allocation3 [shape = 's32[1]{0}', space=sflag, size = 0x4, scoped, tag = 'scoped memory for tpu_custom_call.1']
    #allocation4 [shape = 's32[1]{0}', space=sflag, size = 0x4, scoped, tag = 'scoped memory for tpu_custom_call.1']
    #allocation5 [shape = 'u8[65536]{0}', space=vmem, size = 0x10000, scoped, tag = 'input window, operand 1, single buffered']
    #allocation6 [shape = 's32[1]{0}', space=sflag, size = 0x4, scoped, tag = 'scoped memory for tpu_custom_call.1']
    #allocation7 [shape = 'u8[512]{0}', space=smem, size = 0x200, scoped, tag = 'input window, operand 2, single buffered']
    %8 = vsyncpa [#allocation3], 0
    %9 = vsyncpa [#allocation6], 0
    %10 = vsyncpa [#allocation4], 0
    // Predicated region
    $region2: #{tpu_custom_call.1} parent=1 // pred_check
      _
    $region3: #{tpu_custom_call.1} parent=1 // pred_check_branch
      %12 = sbr.rel (0) target = $region5
    $region4: #{tpu_custom_call.1} parent=1 // pred_region
      %14 = vsyncadd [#allocation3], 0
      %s16 = sshll.u32 %s0, 4
      %s17 = int_to_ptr.hbm [resolvable:$true] %s16
      %s18 = sshll.u32 [#allocation2], 4
      %s19 = int_to_ptr.vmem [resolvable:$true] %s18
      %21 = dma.hbm_to_vmem [thread:$0]  %s17, 32, %s19, [#allocation3]
    $region5: #{tpu_custom_call.1} parent=1 // pred_fallthru
      _
    // Predicated region
    $region6: #{tpu_custom_call.1} parent=1 // pred_check
      _
    $region7: #{tpu_custom_call.1} parent=1 // pred_check_branch
      %23 = sbr.rel (0) target = $region9
    $region8: #{tpu_custom_call.1} parent=1 // pred_region
      %25 = vsyncadd [#allocation6], 0
      %s26 = sshll.u32 %s1, 4
      %s27 = int_to_ptr.hbm [resolvable:$true] %s26
      %s28 = sshll.u32 [#allocation5], 4
      %s29 = int_to_ptr.vmem [resolvable:$true] %s28
      %34 = dma.hbm_to_vmem [thread:$0]  %s27, 2048, %s29, [#allocation6], 128, 128, 8
    $region9: #{tpu_custom_call.1} parent=1 // pred_fallthru
      _
    // Predicated region
    $region10: #{tpu_custom_call.1} parent=1 // pred_check
      _
    $region11: #{tpu_custom_call.1} parent=1 // pred_check_branch
      %36 = sbr.rel (0) target = $region13
    $region12: #{tpu_custom_call.1} parent=1 // pred_region
      %38 = vsyncadd [#allocation4], 0
      %s40 = sshll.u32 %s2, 4
      %s41 = int_to_ptr.vmem [resolvable:$true] %s40
      %43 = dma.vmem_to_smem %s41, 16, [#allocation7], [#allocation4]
    $region13: #{tpu_custom_call.1} parent=1 // pred_fallthru
      _
    // Predicated region
    $region14: #{tpu_custom_call.1} parent=1 // pred_check
      _
    $region15: #{tpu_custom_call.1} parent=1 // pred_check_branch
      %45 = sbr.rel (0) target = $region17
    $region16: #{tpu_custom_call.1} parent=1 // pred_region
      %47 = dma.done [#allocation3], 32
    $region17: #{tpu_custom_call.1} parent=1 // pred_fallthru
      _
    // Predicated region
    $region18: #{tpu_custom_call.1} parent=1 // pred_check
      _
    $region19: #{tpu_custom_call.1} parent=1 // pred_check_branch
      %49 = sbr.rel (0) target = $region21
    $region20: #{tpu_custom_call.1} parent=1 // pred_region
      %51 = dma.done [#allocation6], 2048
    $region21: #{tpu_custom_call.1} parent=1 // pred_fallthru
      _
    // Predicated region
    $region22: #{tpu_custom_call.1} parent=1 // pred_check
      _
    $region23: #{tpu_custom_call.1} parent=1 // pred_check_branch
      %53 = sbr.rel (0) target = $region25
    $region24: #{tpu_custom_call.1} parent=1 // pred_region
      %55 = dma.done [#allocation4], 16
    $region25: #{tpu_custom_call.1} parent=1 // pred_fallthru
      _
    %56 = sfence
    %v57 = vld [vmem:[#allocation2] sm:$0x3]
    %v58 = vld [vmem:[#allocation5] sm:$0xff]
    %v59 = vld [vmem:[#allocation5 + $0x8] sm:$0xff]
    %v60 = vld [vmem:[#allocation5 + $0x10] sm:$0xff]
    %v61 = vld [vmem:[#allocation5 + $0x18] sm:$0xff]
    %v62 = vld [vmem:[#allocation5 + $0x20] sm:$0xff]
    %v63 = vld [vmem:[#allocation5 + $0x28] sm:$0xff]
    %v64 = vld [vmem:[#allocation5 + $0x30] sm:$0xff]
    %v65 = vld [vmem:[#allocation5 + $0x38] sm:$0xff]
    %v66 = vld [vmem:[#allocation5 + $0x40] sm:$0xff]
    %v67 = vld [vmem:[#allocation5 + $0x48] sm:$0xff]
    %v68 = vld [vmem:[#allocation5 + $0x50] sm:$0xff]
    %v69 = vld [vmem:[#allocation5 + $0x58] sm:$0xff]
    %v70 = vld [vmem:[#allocation5 + $0x60] sm:$0xff]
    %v71 = vld [vmem:[#allocation5 + $0x68] sm:$0xff]
    %v72 = vld [vmem:[#allocation5 + $0x70] sm:$0xff]
    %v73 = vld [vmem:[#allocation5 + $0x78] sm:$0xff]
    %74 = vmatpush.msra.mxu0 %v73
    %75 = vmatpush.msra.mxu0 %v72
    %76 = vmatpush.msra.mxu0 %v71
    %77 = vmatpush.msra.mxu0 %v70
    %78 = vmatpush.msra.mxu0 %v69
    %79 = vmatpush.msra.mxu0 %v68
    %80 = vmatpush.msra.mxu0 %v67
    %81 = vmatpush.msra.mxu0 %v66
    %82 = vmatpush.msra.mxu0 %v65
    %83 = vmatpush.msra.mxu0 %v64
    %84 = vmatpush.msra.mxu0 %v63
    %85 = vmatpush.msra.mxu0 %v62
    %86 = vmatpush.msra.mxu0 %v61
    %87 = vmatpush.msra.mxu0 %v60
    %88 = vmatpush.msra.mxu0 %v59
    %89 = vmatpush.msra.mxu0 %v58
    %90 = vmatmul.f32.gmra.mxu0 %v57
    %v91 = vpop.f32.mrf.mxu0
    %v92 = vadd.f32 0.0, %v91
    %93 = vdwg.mxu0
    %v94 = vmul.f32 %v57, %v57
    %95 = vmatpush.msra.mxu0 %v73
    %96 = vmatpush.msra.mxu0 %v72
    %97 = vmatpush.msra.mxu0 %v71
    %98 = vmatpush.msra.mxu0 %v70
    %99 = vmatpush.msra.mxu0 %v69
    %100 = vmatpush.msra.mxu0 %v68
    %101 = vmatpush.msra.mxu0 %v67
    %102 = vmatpush.msra.mxu0 %v66
    %103 = vmatpush.msra.mxu0 %v65
    %104 = vmatpush.msra.mxu0 %v64
    %105 = vmatpush.msra.mxu0 %v63
    %106 = vmatpush.msra.mxu0 %v62
    %107 = vmatpush.msra.mxu0 %v61
    %108 = vmatpush.msra.mxu0 %v60
    %109 = vmatpush.msra.mxu0 %v59
    %110 = vmatpush.msra.mxu0 %v58
    %111 = vmatmul.f32.gmra.mxu0 %v94
    %v112 = vpop.f32.mrf.mxu0
    %v113 = vadd.f32 0.0, %v112
    %114 = vdwg.mxu0
    %v115 = vmul.f32 %v92, %v92
    %v116 = vsub.f32 %v113, %v115
    %v117 = vadd.f32 %v116, 1e-05
    %v118 = vrsqrt.pop %v117
    %v119 = vmul.f32 %v118, %v117
    %v120 = vmul.f32 %v119, %v118
    %v121 = vmul.f32 0.5, %v120
    %v122 = vsub.f32 1.5, %v121
    %v123 = vmul.f32 %v118, %v122
    %vm124 = vweird.f32 %v117
    %vm125 = vweird.f32 %v118
    %vm126 = vmor %vm124, %vm125
    %v127 = vsel %vm126, %v118, %v123
    %s128 = sld [smem:[#allocation7]]
    %v129 = vstv %s128
    %v130 = vmul.f32 %v92, %v129
    %132 = vrot.lane.b32.xlu0 %v130, 4
    %v133 = vpop.permute.xlu0 %132
    %v135 = vsub.f32 %v92, %v133
    %137 = vrot.lane.b32.xlu0 %v135, 124
    %v138 = vpop.permute.xlu0 %137
    %v140 = vmul.f32 %v127, %v138
    %s141 = sld [smem:[#allocation7 + $0x1]]
    %v142 = vstv %s141
    %v143 = vadd.f32 %v140, %v142
    %144 = vxpose.xlu0.b32.start [1/16] %v143, 128
    %145 = vxpose.xlu0.b32.cont [2/16] 0.0, 128
    %146 = vxpose.xlu0.b32.cont [3/16] 0.0, 128
    %147 = vxpose.xlu0.b32.cont [4/16] 0.0, 128
    %148 = vxpose.xlu0.b32.cont [5/16] 0.0, 128
    %149 = vxpose.xlu0.b32.cont [6/16] 0.0, 128
    %150 = vxpose.xlu0.b32.cont [7/16] 0.0, 128
    %151 = vxpose.xlu0.b32.cont [8/16] 0.0, 128
    %152 = vxpose.xlu0.b32.cont [9/16] 0.0, 128
    %153 = vxpose.xlu0.b32.cont [10/16] 0.0, 128
    %154 = vxpose.xlu0.b32.cont [11/16] 0.0, 128
    %155 = vxpose.xlu0.b32.cont [12/16] 0.0, 128
    %156 = vxpose.xlu0.b32.cont [13/16] 0.0, 128
    %157 = vxpose.xlu0.b32.cont [14/16] 0.0, 128
    %158 = vxpose.xlu0.b32.cont [15/16] 0.0, 128
    %159 = vxpose.xlu0.b32.end [16/16] 0.0, 128
    %v160 = vpop.trf.xlu0
    %v161 = vpop.trf.xlu0
    %v162 = vpop.trf.xlu0
    %v163 = vpop.trf.xlu0
    %v164 = vpop.trf.xlu0
    %v165 = vpop.trf.xlu0
    %v166 = vpop.trf.xlu0
    %v167 = vpop.trf.xlu0
    %v168 = vpop.trf.xlu0
    %v169 = vpop.trf.xlu0
    %v170 = vpop.trf.xlu0
    %v171 = vpop.trf.xlu0
    %v172 = vpop.trf.xlu0
    %v173 = vpop.trf.xlu0
    %v174 = vpop.trf.xlu0
    %v175 = vpop.trf.xlu0
    %vm176 = vcmask 11264
    %177 = vst.msk [vmem:[%s3] sm:$0xf] %vm176, %v160
    // Predicated region
    $region26: #{tpu_custom_call.1} parent=1 // pred_check
      _
    $region27: #{tpu_custom_call.1} parent=1 // pred_check_branch
      %179 = sbr.rel (0) target = $region29
    $region28: #{tpu_custom_call.1} parent=1 // pred_region
      _
    $region29: #{tpu_custom_call.1} parent=1 // pred_fallthru
      _
    // Predicated region
    $region30: #{tpu_custom_call.1} parent=1 // pred_check
      _
    $region31: #{tpu_custom_call.1} parent=1 // pred_check_branch
      %181 = sbr.rel (0) target = $region33
    $region32: #{tpu_custom_call.1} parent=1 // pred_region
      _
    $region33: #{tpu_custom_call.1} parent=1 // pred_fallthru
      _
    %182 = vsyncpa [#allocation3], 1
    %183 = vsyncpa [#allocation6], 1
    %184 = vsyncpa [#allocation4], 1

</llo_original>
